<compile_context>
chip_gen: v5e
topology: v5e:2x2
jax: 0.10.0
libtpu: 0.0.40
codegen_flags: <defaults>
</compile_context>

<pallas_src>
import functools

import jax
import jax.numpy as jnp
import numpy as np
from jax.experimental import pallas as pl
from jax.experimental.pallas import tpu as pltpu

EPS = 1e-10
CP = 16  # one-hot / class dimension padded to a sublane multiple


def _softplus(x):
    # PyTorch F.softplus with beta=1, threshold=20
    return jnp.where(x > 20.0, x, jnp.log1p(jnp.exp(jnp.minimum(x, 20.0))))


def _sigmoid(x):
    return jax.nn.sigmoid(x)


def _round_up(x, m):
    return ((x + m - 1) // m) * m


# ----------------------------------------------------------------------------
# One-time host-side packing of all parameters into a single (R, 128) f32 slab.
# ----------------------------------------------------------------------------
def pack_params(params):
    """Exact math rearrangements of the module's forward (no approximation):

      * embedding gather + concat + W_ih  ->  onehot @ (emb @ W_ih[:, :E]^T)
        plus a dt column and a fused LSTM bias.
      * linear1 (w1, b1) folded into the time column of linear2.
      * g-gate (tanh) pre-activation pre-scaled by 2 so the kernel can use
        tanh(z) = 2*sigmoid(2z) - 1 and run ONE sigmoid per LSTM step; the
        per-lane affine (a, b) that undoes it is stored as two slab rows.
    """
    emb = np.asarray(params["emb"], np.float32)        # (C, E)
    w_ih = np.asarray(params["w_ih"], np.float32)      # (4H, E+1)
    w_hh = np.asarray(params["w_hh"], np.float32)      # (4H, H)
    b_ih = np.asarray(params["b_ih"], np.float32)
    b_hh = np.asarray(params["b_hh"], np.float32)
    w1 = float(np.asarray(params["w1"])[0, 0])
    b1 = float(np.asarray(params["b1"])[0])
    w2 = np.asarray(params["w2"], np.float32)           # (M, H+1)
    b2 = np.asarray(params["b2"], np.float32)           # (M,)
    w_mid = np.asarray(params["w_mid"], np.float32)     # (n_mid, M, M)
    b_mid = np.asarray(params["b_mid"], np.float32)     # (n_mid, M)
    w3 = np.asarray(params["w3"], np.float32)           # (1, M)
    b3 = float(np.asarray(params["b3"])[0])

    C, E = emb.shape
    G = w_ih.shape[0]          # 4H
    H = w_hh.shape[1]
    M = w2.shape[0]
    n_mid = w_mid.shape[0]
    assert G == 4 * H and G <= 128 and M <= 128 and C <= CP

    LW = 128  # lane width of the packed slab

    #   x @ W_ih^T = onehot @ (emb @ W_ih[:, :E]^T) + dt * W_ih[:, E]
    emb_proj = emb @ w_ih[:, :E].T                       # (C, 4H)
    w_dt = w_ih[:, E].copy()                             # (4H,)
    b_lstm = b_ih + b_hh                                 # (4H,)
    whh_t = w_hh.T.copy()                                # (H, 4H)
    #   linear2([h, w1*tt + b1]) = h @ w2h^T + tt*(w1*w2t) + (b1*w2t + b2)
    w2h_t = w2[:, :H].T                                  # (H, M)
    w2t = w2[:, H]                                       # (M,)
    w2t_eff = w1 * w2t
    b2_eff = b1 * w2t + b2
    wmid_t = np.transpose(w_mid, (0, 2, 1))              # (n_mid, M, M)

    # Row layout inside the slab.
    r_embp = 0
    r_whh = CP
    r_blstm = CP + H
    r_wdt = r_blstm + 1
    r_ga = r_wdt + 1
    r_gb = r_ga + 1
    r_w2h = _round_up(r_gb + 1, 8)
    r_wmid = r_w2h + H
    r_w2t = r_wmid + n_mid * M
    r_b2 = r_w2t + 1
    r_bmid = r_b2 + 1
    r_w3 = r_bmid + n_mid
    r_b3 = r_w3 + 1
    R = _round_up(r_b3 + 1, 8)

    P = np.zeros((R, LW), np.float32)
    P[r_embp:r_embp + C, :G] = emb_proj
    P[r_whh:r_whh + H, :G] = whh_t
    P[r_blstm, :G] = b_lstm
    P[r_wdt, :G] = w_dt

    # --- tanh-via-sigmoid trick: scale g-gate pre-activation columns by 2 ---
    gsl = slice(2 * H, 3 * H)
    P[r_embp:r_embp + C, gsl] *= 2.0
    P[r_whh:r_whh + H, gsl] *= 2.0
    P[r_blstm, gsl] *= 2.0
    P[r_wdt, gsl] *= 2.0
    # per-lane affine recovering the gate activations: act = a*sigmoid(pre)+b
    P[r_ga, :G] = 1.0
    P[r_ga, gsl] = 2.0
    P[r_gb, gsl] = -1.0

    P[r_w2h:r_w2h + H, :M] = w2h_t
    for l in range(n_mid):
        P[r_wmid + l * M:r_wmid + (l + 1) * M, :M] = wmid_t[l]
        P[r_bmid + l, :M] = b_mid[l]
    P[r_w2t, :M] = w2t_eff
    P[r_b2, :M] = b2_eff
    P[r_w3, :M] = w3[0]
    P[r_b3, 0] = b3

    rows = dict(embp=r_embp, whh=r_whh, blstm=r_blstm, wdt=r_wdt,
                ga=r_ga, gb=r_gb, w2h=r_w2h, wmid=r_wmid, w2t=r_w2t,
                b2=r_b2, bmid=r_bmid, w3=r_w3, b3=r_b3)
    dims = dict(H=H, M=M, G=G, n_mid=n_mid)
    return jnp.asarray(P), rows, dims


# ----------------------------------------------------------------------------
# Kernel (one grid step = one independent (B, L) problem instance)
# ----------------------------------------------------------------------------
def gtpp_kernel(p_ref, d_ref, o_ref, *, T, B, H, M, G, n_mid, rows):
    TB = T * B
    f32 = jnp.float32

    # ---- per-problem data slab (leading grid dim squeezed away) ----
    ev = d_ref[0:TB, 0:1]        # (TB, 1) event ids (as f32), time-major flat
    dt = d_ref[0:TB, 1:2]        # (TB, 1) event times, time-major flat
    tt = d_ref[TB:TB + B, 0:1]   # (B, 1)  target times

    # ---- params: static slices of the resident packed slab ----
    emb_proj = p_ref[rows['embp']:rows['embp'] + CP, 0:G]    # (CP, 4H)
    whh_t = p_ref[rows['whh']:rows['whh'] + H, 0:G]          # (H, 4H)
    b_lstm = p_ref[rows['blstm']:rows['blstm'] + 1, 0:G]     # (1, 4H)
    w_dt = p_ref[rows['wdt']:rows['wdt'] + 1, 0:G]           # (1, 4H)
    g_a = p_ref[rows['ga']:rows['ga'] + 1, 0:G]              # (1, 4H)
    g_b = p_ref[rows['gb']:rows['gb'] + 1, 0:G]              # (1, 4H)
    w2h_t = p_ref[rows['w2h']:rows['w2h'] + H, 0:M]          # (H, M)
    w2t_eff = p_ref[rows['w2t']:rows['w2t'] + 1, 0:M]        # (1, M)
    b2_eff = p_ref[rows['b2']:rows['b2'] + 1, 0:M]           # (1, M)
    w3_row = p_ref[rows['w3']:rows['w3'] + 1, 0:M]           # (1, M)
    b3 = p_ref[rows['b3']:rows['b3'] + 1, 0:1]               # (1, 1)

    # ---- hoisted LSTM input projection: ONE (TB,CP)x(CP,4H) matmul ----
    cls = jax.lax.broadcasted_iota(jnp.int32, (TB, CP), 1)
    onehot = (ev.astype(jnp.int32) == cls).astype(f32)        # (TB, CP)
    xproj = (jnp.dot(onehot, emb_proj, preferred_element_type=f32)
             + dt * w_dt + b_lstm)                            # (TB, 4H)

    # ---- LSTM recurrence (PyTorch gate order i, f, g, o), fully unrolled ---
    # Single sigmoid over the full gate vreg per step; g recovered with one
    # per-lane FMA (tanh(z) = 2*sigmoid(2z) - 1; 2z was applied at pack time).
    h = jnp.zeros((B, H), f32)
    c = jnp.zeros((B, H), f32)
    for ti in range(T):
        pre = (xproj[ti * B:(ti + 1) * B, :]
               + jnp.dot(h, whh_t, preferred_element_type=f32))   # (B, 4H)
        act = g_a * _sigmoid(pre) + g_b
        i_g = act[:, 0:H]
        f_g = act[:, H:2 * H]
        g_g = act[:, 2 * H:3 * H]
        o_g = act[:, 3 * H:4 * H]
        c = f_g * c + i_g * g_g
        h = o_g * jnp.tanh(c)

    # ---- IntensityNet with analytic forward-mode derivative w.r.t. tt ----
    # linear1 (w1, b1) is folded into w2t_eff / b2_eff at packing time.
    z = jnp.dot(h, w2h_t, preferred_element_type=f32) + tt * w2t_eff + b2_eff
    out = jnp.tanh(z)                                       # (B, M)
    dout = (1.0 - out * out) * w2t_eff                      # d out / d tt

    for l in range(n_mid):
        wl = p_ref[rows['wmid'] + l * M:rows['wmid'] + (l + 1) * M, 0:M]
        bl = p_ref[rows['bmid'] + l:rows['bmid'] + l + 1, 0:M]
        # value + tangent in ONE stacked (2B, M) x (M, M) matmul
        stacked = jnp.concatenate([out, dout], axis=0)       # (2B, M)
        zz = jnp.dot(stacked, wl, preferred_element_type=f32)
        new_out = jnp.tanh(zz[0:B, :] + bl)
        dout = (1.0 - new_out * new_out) * zz[B:2 * B, :]
        out = new_out

    stacked = jnp.concatenate([out, dout], axis=0)           # (2B, M)
    sums = jnp.sum(stacked * w3_row, axis=-1, keepdims=True)  # (2B, 1)
    u = sums[0:B, :] + b3                                     # (B, 1)
    du = sums[B:2 * B, :]                                     # (B, 1)

    s1 = _softplus(u)            # linear3's Softplus
    ds1 = _sigmoid(u) * du
    intl = _softplus(s1)         # outer F.softplus
    dintl = _sigmoid(s1) * ds1

    lmbda = dintl * (1.0 / B)                                   # d mean(intl)/d tt
    int_mean = jnp.mean(intl, keepdims=True)                    # (1, 1)
    log_mean = jnp.mean(jnp.log(lmbda + EPS), keepdims=True)    # (1, 1)
    nll = int_mean - log_mean                                   # mean_first=True

    # ---- single lane-dense (B, 128) output slab ----
    lane = jax.lax.broadcasted_iota(jnp.int32, (B, 128), 1)
    scal = (jnp.where(lane == 0, nll, 0.0)
            + jnp.where(lane == 1, log_mean, 0.0)
            + jnp.where(lane == 2, int_mean, 0.0))
    o_ref[...] = jnp.where(lane == 4, lmbda, scal)


# ----------------------------------------------------------------------------
# Wrapper: accepts a single (B, L) problem or a stack of (P, B, L) problems.
# ----------------------------------------------------------------------------
def gtpp_forward(packed_p, time_seq, event_seq, *, rows, dims):
    single = (time_seq.ndim == 2)
    if single:
        time_seq = time_seq[None]
        event_seq = event_seq[None]
    Pn, B, L = time_seq.shape
    T = L - 1
    TB = T * B
    H, M, G, n_mid = dims['H'], dims['M'], dims['G'], dims['n_mid']
    R = packed_p.shape[0]

    # Tiny per-call data slab per problem (time-major flat events/times +
    # target time).  ~0.5 KiB/problem -> DMA fixed latency dominates; do not
    # pad wider.
    ev_tm = jnp.swapaxes(event_seq[:, :, :T], 1, 2).reshape(Pn, TB, 1)
    dt_tm = jnp.swapaxes(time_seq[:, :, :T], 1, 2).reshape(Pn, TB, 1)
    tt = time_seq[:, :, -1:]
    data = jnp.concatenate(
        [jnp.concatenate([ev_tm.astype(jnp.float32),
                          dt_tm.astype(jnp.float32)], axis=2),
         jnp.concatenate([tt.astype(jnp.float32),
                          jnp.zeros_like(tt, jnp.float32)], axis=2)],
        axis=1)                                                # (Pn, TB+B, 2)

    kernel = functools.partial(gtpp_kernel, T=T, B=B, H=H, M=M, G=G,
                               n_mid=n_mid, rows=rows)

    o = pl.pallas_call(
        kernel,
        out_shape=jax.ShapeDtypeStruct((Pn, B, 128), jnp.float32),
        grid=(Pn,),
        in_specs=[
            # params: constant block index -> stays VMEM-resident (no re-DMA)
            pl.BlockSpec((R, 128), lambda p: (0, 0)),
            # per-problem data slab, leading grid dim squeezed
            pl.BlockSpec((None, TB + B, 2), lambda p: (p, 0, 0)),
        ],
        out_specs=pl.BlockSpec((None, B, 128), lambda p: (p, 0, 0)),
        compiler_params=pltpu.CompilerParams(
            dimension_semantics=("parallel",)),
    )(packed_p, data)

    nll = o[:, 0, 0]
    loglm = o[:, 0, 1]
    intlm = o[:, 0, 2]
    lmbda = o[:, :, 4]
    if single:
        return nll[0], loglm[0], intlm[0], lmbda[0]
    return nll, loglm, intlm, lmbda


# ---------------- pure-JAX reference (for correctness check) ----------------
def gtpp_reference(params, time_seq, event_seq):
    B, L = time_seq.shape
    H = params["w_hh"].shape[1]
    emb = jnp.take(params["emb"], event_seq, axis=0)
    lstm_input = jnp.concatenate([emb[:, :-1], time_seq[:, :-1, None]], axis=-1)

    def lstm_step(carry, x):
        h, c = carry
        gates = (
            x @ params["w_ih"].T + h @ params["w_hh"].T
            + params["b_ih"] + params["b_hh"]
        )
        i_g, f_g, g_g, o_g = jnp.split(gates, 4, axis=-1)
        c = jax.nn.sigmoid(f_g) * c + jax.nn.sigmoid(i_g) * jnp.tanh(g_g)
        h = jax.nn.sigmoid(o_g) * jnp.tanh(c)
        return (h, c), None

    (h_last, _), _ = jax.lax.scan(
        lstm_step,
        (jnp.zeros((B, H)), jnp.zeros((B, H))),
        jnp.transpose(lstm_input, (1, 0, 2)),
    )
    tt = time_seq[:, -1]

    def int_mean_fn(tt_):
        t = params["w1"][0, 0] * tt_[:, None] + params["b1"][0]
        x = jnp.concatenate([h_last, t], axis=-1)
        out = jnp.tanh(x @ params["w2"].T + params["b2"])
        for wl, bl in zip(params["w_mid"], params["b_mid"]):
            out = jnp.tanh(out @ wl.T + bl)
        u = out @ params["w3"].T + params["b3"]
        intl = _softplus(_softplus(u))
        return jnp.mean(intl), intl

    (int_mean, _intl), lmbda = jax.value_and_grad(int_mean_fn, has_aux=True)(tt)
    log_mean = jnp.mean(jnp.log(lmbda + EPS))
    nll = int_mean - log_mean   # mean_first=True
    return nll, log_mean, int_mean, lmbda


# ---------------- deterministic parameter init ----------------
def init_params(key, event_class, emb_dim, hid_dim, mlp_dim, n_mid):
    ks = jax.random.split(key, 16)
    F = emb_dim + 1

    def pos(k, shape, scale=0.3):
        # IntensityNet params: abs + clamp(min=eps), per init_weights_positive
        return jnp.maximum(jnp.abs(jax.random.normal(k, shape) * scale),
                           EPS).astype(jnp.float32)

    def nrm(k, shape, scale=0.3):
        return (jax.random.normal(k, shape) * scale).astype(jnp.float32)

    return {
        # GTPP params (not abs'd)
        "emb": nrm(ks[0], (event_class, emb_dim)),
        "w_ih": nrm(ks[1], (4 * hid_dim, F)),
        "w_hh": nrm(ks[2], (4 * hid_dim, hid_dim)),
        "b_ih": nrm(ks[3], (4 * hid_dim,)),
        "b_hh": nrm(ks[4], (4 * hid_dim,)),
        # IntensityNet params (positive; forward-time clamp is a no-op here)
        "w1": pos(ks[5], (1, 1)),
        "b1": pos(ks[6], (1,)),
        "w2": pos(ks[7], (mlp_dim, hid_dim + 1)),
        "b2": pos(ks[8], (mlp_dim,)),
        "w_mid": pos(ks[9], (n_mid, mlp_dim, mlp_dim)),
        "b_mid": pos(ks[10], (n_mid, mlp_dim)),
        "w3": pos(ks[11], (1, mlp_dim)),
        "b3": pos(ks[12], (1,)),
    }


if __name__ == "__main__":
    # config
    B, L = 8, 8
    event_class, emb_dim, hid_dim, mlp_dim, mlp_layer = 10, 8, 32, 32, 2
    n_mid = mlp_layer - 1
    NP = 4  # independent problem instances for the gridded call

    key = jax.random.PRNGKey(0)
    kp, kt, ke = jax.random.split(key, 3)
    params = init_params(kp, event_class, emb_dim, hid_dim, mlp_dim, n_mid)

    # deterministic inputs: positive, increasing event times
    dt = jax.random.uniform(kt, (NP, B, L), minval=0.1, maxval=1.0)
    time_seq = jnp.cumsum(dt, axis=-1).astype(jnp.float32)            # (NP,B,L)
    event_seq = jax.random.randint(ke, (NP, B, L), 0,
                                   event_class).astype(jnp.int32)

    # One-time packing of all weights into a single lane-dense slab.
    packed_p, rows, dims = pack_params(params)
    run = jax.jit(functools.partial(gtpp_forward, rows=rows, dims=dims))

    # Tolerances are sized for TPU default (bf16-pass) matmul precision on
    # both the kernel and the XLA reference; with exact-f32 matmuls the two
    # sides agree to ~1e-5.
    SC = dict(rtol=1e-2, atol=1e-5)
    LM = dict(rtol=5e-2, atol=1e-6)

    # 1) single-problem call (matches the module's forward exactly)
    nll, loglm, intlm, lmbda = run(packed_p, time_seq[0], event_seq[0])
    jax.block_until_ready((nll, loglm, intlm, lmbda))
    nll_r, loglm_r, intlm_r, lmbda_r = gtpp_reference(
        params, time_seq[0], event_seq[0])
    np.testing.assert_allclose(np.asarray(nll), np.asarray(nll_r), **SC)
    np.testing.assert_allclose(np.asarray(loglm), np.asarray(loglm_r), **SC)
    np.testing.assert_allclose(np.asarray(intlm), np.asarray(intlm_r), **SC)
    np.testing.assert_allclose(np.asarray(lmbda), np.asarray(lmbda_r), **LM)

    # 2) batched call: grid=(NP,) amortises launch + weight DMA over problems
    nll_b, loglm_b, intlm_b, lmbda_b = run(packed_p, time_seq, event_seq)
    jax.block_until_ready((nll_b, loglm_b, intlm_b, lmbda_b))
    for p in range(NP):
        nr, lr, ir, lm = gtpp_reference(params, time_seq[p], event_seq[p])
        np.testing.assert_allclose(np.asarray(nll_b[p]), np.asarray(nr), **SC)
        np.testing.assert_allclose(np.asarray(intlm_b[p]), np.asarray(ir), **SC)
        np.testing.assert_allclose(np.asarray(lmbda_b[p]), np.asarray(lm), **LM)

    print("KERNEL_OK")
</pallas_src>

<mosaic_0001>
module attributes {stable_mosaic.version = 11 : i64} {
  func.func @gtpp_kernel(%arg0: i32, %arg1: memref<128x128xf32, #tpu.memory_space<vmem>>, %arg2: memref<1x64x2xf32, #tpu.memory_space<vmem>>, %arg3: memref<1x8x128xf32, #tpu.memory_space<vmem>>) attributes {dimension_semantics = [#tpu.dimension_semantics<parallel>], iteration_bounds = array<i64: 1>, scalar_prefetch = 0 : i64, scratch_operands = 0 : i64, tpu.core_type = #tpu.core_type<tc>, window_params = [{pipeline_mode = #tpu.pipeline_mode<synchronous>, transform_indices = @transform_0, window_bounds = array<i64: 128, 128>}, {transform_indices = @transform_1, window_bounds = array<i64: 1, 64, 2>}, {transform_indices = @transform_2, window_bounds = array<i64: 1, 8, 128>}]} {
    %c0 = arith.constant 0 : index
    %c0_0 = arith.constant 0 : index
    %c0_1 = arith.constant 0 : index
    %0 = vector.load %arg2[%c0, %c0_0, %c0_1] : memref<1x64x2xf32, #tpu.memory_space<vmem>>, vector<1x56x1xf32>
    %1 = vector.shape_cast %0 : vector<1x56x1xf32> to vector<56x1xf32>
    %c0_2 = arith.constant 0 : index
    %c0_3 = arith.constant 0 : index
    %c1 = arith.constant 1 : index
    %2 = vector.load %arg2[%c0_2, %c0_3, %c1] : memref<1x64x2xf32, #tpu.memory_space<vmem>>, vector<1x56x1xf32>
    %3 = vector.shape_cast %2 : vector<1x56x1xf32> to vector<56x1xf32>
    %c0_4 = arith.constant 0 : index
    %c56 = arith.constant 56 : index
    %c0_5 = arith.constant 0 : index
    %4 = vector.load %arg2[%c0_4, %c56, %c0_5] : memref<1x64x2xf32, #tpu.memory_space<vmem>>, vector<1x8x1xf32>
    %5 = vector.shape_cast %4 : vector<1x8x1xf32> to vector<8x1xf32>
    %c0_6 = arith.constant 0 : index
    %c0_7 = arith.constant 0 : index
    %6 = vector.load %arg1[%c0_6, %c0_7] : memref<128x128xf32, #tpu.memory_space<vmem>>, vector<16x128xf32>
    %c16 = arith.constant 16 : index
    %c0_8 = arith.constant 0 : index
    %7 = vector.load %arg1[%c16, %c0_8] : memref<128x128xf32, #tpu.memory_space<vmem>>, vector<32x128xf32>
    %c48 = arith.constant 48 : index
    %c0_9 = arith.constant 0 : index
    %8 = vector.load %arg1[%c48, %c0_9] : memref<128x128xf32, #tpu.memory_space<vmem>>, vector<1x128xf32>
    %c49 = arith.constant 49 : index
    %c0_10 = arith.constant 0 : index
    %9 = vector.load %arg1[%c49, %c0_10] : memref<128x128xf32, #tpu.memory_space<vmem>>, vector<1x128xf32>
    %c50 = arith.constant 50 : index
    %c0_11 = arith.constant 0 : index
    %10 = vector.load %arg1[%c50, %c0_11] : memref<128x128xf32, #tpu.memory_space<vmem>>, vector<1x128xf32>
    %c51 = arith.constant 51 : index
    %c0_12 = arith.constant 0 : index
    %11 = vector.load %arg1[%c51, %c0_12] : memref<128x128xf32, #tpu.memory_space<vmem>>, vector<1x128xf32>
    %c56_13 = arith.constant 56 : index
    %c0_14 = arith.constant 0 : index
    %12 = vector.load %arg1[%c56_13, %c0_14] : memref<128x128xf32, #tpu.memory_space<vmem>>, vector<32x32xf32>
    %c120 = arith.constant 120 : index
    %c0_15 = arith.constant 0 : index
    %13 = vector.load %arg1[%c120, %c0_15] : memref<128x128xf32, #tpu.memory_space<vmem>>, vector<1x32xf32>
    %c121 = arith.constant 121 : index
    %c0_16 = arith.constant 0 : index
    %14 = vector.load %arg1[%c121, %c0_16] : memref<128x128xf32, #tpu.memory_space<vmem>>, vector<1x32xf32>
    %c123 = arith.constant 123 : index
    %c0_17 = arith.constant 0 : index
    %15 = vector.load %arg1[%c123, %c0_17] : memref<128x128xf32, #tpu.memory_space<vmem>>, vector<1x32xf32>
    %c124 = arith.constant 124 : index
    %c0_18 = arith.constant 0 : index
    %16 = vector.load %arg1[%c124, %c0_18] : memref<128x128xf32, #tpu.memory_space<vmem>>, vector<1x1xf32>
    %17 = tpu.iota {dimensions = array<i32: 1>} : vector<56x16xi32>
    %18 = arith.fptosi %1 : vector<56x1xf32> to vector<56x1xi32>
    %19 = vector.broadcast %18 : vector<56x1xi32> to vector<56x16xi32>
    %20 = arith.cmpi eq, %19, %17 : vector<56x16xi32>
    %21 = arith.extui %20 : vector<56x16xi1> to vector<56x16xi32>
    %22 = arith.sitofp %21 : vector<56x16xi32> to vector<56x16xf32>
    %cst = arith.constant dense<0.000000e+00> : vector<56x128xf32>
    %23 = tpu.matmul %22, %6, %cst {dimension_numbers = #tpu.dot_dimension_numbers<[1], [0], [0], [1], [0, 0, 1, 1], [], []>} : vector<56x16xf32>, vector<16x128xf32>, vector<56x128xf32> -> vector<56x128xf32>
    %24 = vector.broadcast %3 : vector<56x1xf32> to vector<56x128xf32>
    %25 = vector.broadcast %9 : vector<1x128xf32> to vector<56x128xf32>
    %26 = arith.mulf %24, %25 : vector<56x128xf32>
    %27 = arith.addf %23, %26 : vector<56x128xf32>
    %28 = vector.broadcast %8 : vector<1x128xf32> to vector<56x128xf32>
    %29 = arith.addf %27, %28 : vector<56x128xf32>
    %cst_19 = arith.constant 0.000000e+00 : f32
    %30 = vector.broadcast %cst_19 : f32 to vector<8x32xf32>
    %cst_20 = arith.constant 0.000000e+00 : f32
    %31 = vector.broadcast %cst_20 : f32 to vector<8x32xf32>
    %32 = vector.extract_strided_slice %29 {offsets = [0, 0], sizes = [8, 128], strides = [1, 1]} : vector<56x128xf32> to vector<8x128xf32>
    %cst_21 = arith.constant dense<0.000000e+00> : vector<8x128xf32>
    %33 = tpu.matmul %30, %7, %cst_21 {dimension_numbers = #tpu.dot_dimension_numbers<[1], [0], [0], [1], [0, 0, 1, 1], [], []>} : vector<8x32xf32>, vector<32x128xf32>, vector<8x128xf32> -> vector<8x128xf32>
    %34 = arith.addf %32, %33 : vector<8x128xf32>
    %35 = arith.negf %34 : vector<8x128xf32>
    %36 = math.exp %35 : vector<8x128xf32>
    %cst_22 = arith.constant 1.000000e+00 : f32
    %37 = vector.broadcast %cst_22 : f32 to vector<8x128xf32>
    %38 = arith.addf %37, %36 : vector<8x128xf32>
    %39 = arith.divf %37, %38 : vector<8x128xf32>
    %40 = vector.broadcast %10 : vector<1x128xf32> to vector<8x128xf32>
    %41 = arith.mulf %40, %39 : vector<8x128xf32>
    %42 = vector.broadcast %11 : vector<1x128xf32> to vector<8x128xf32>
    %43 = arith.addf %41, %42 : vector<8x128xf32>
    %44 = vector.extract_strided_slice %43 {offsets = [0, 0], sizes = [8, 32], strides = [1, 1]} : vector<8x128xf32> to vector<8x32xf32>
    %45 = vector.extract_strided_slice %43 {offsets = [0, 32], sizes = [8, 32], strides = [1, 1]} : vector<8x128xf32> to vector<8x32xf32>
    %46 = vector.extract_strided_slice %43 {offsets = [0, 64], sizes = [8, 32], strides = [1, 1]} : vector<8x128xf32> to vector<8x32xf32>
    %47 = vector.extract_strided_slice %43 {offsets = [0, 96], sizes = [8, 32], strides = [1, 1]} : vector<8x128xf32> to vector<8x32xf32>
    %48 = arith.mulf %45, %31 : vector<8x32xf32>
    %49 = arith.mulf %44, %46 : vector<8x32xf32>
    %50 = arith.addf %48, %49 : vector<8x32xf32>
    %51 = math.tanh %50 : vector<8x32xf32>
    %52 = arith.mulf %47, %51 : vector<8x32xf32>
    %53 = vector.extract_strided_slice %29 {offsets = [8, 0], sizes = [8, 128], strides = [1, 1]} : vector<56x128xf32> to vector<8x128xf32>
    %cst_23 = arith.constant dense<0.000000e+00> : vector<8x128xf32>
    %54 = tpu.matmul %52, %7, %cst_23 {dimension_numbers = #tpu.dot_dimension_numbers<[1], [0], [0], [1], [0, 0, 1, 1], [], []>} : vector<8x32xf32>, vector<32x128xf32>, vector<8x128xf32> -> vector<8x128xf32>
    %55 = arith.addf %53, %54 : vector<8x128xf32>
    %56 = arith.negf %55 : vector<8x128xf32>
    %57 = math.exp %56 : vector<8x128xf32>
    %cst_24 = arith.constant 1.000000e+00 : f32
    %58 = vector.broadcast %cst_24 : f32 to vector<8x128xf32>
    %59 = arith.addf %58, %57 : vector<8x128xf32>
    %60 = arith.divf %58, %59 : vector<8x128xf32>
    %61 = vector.broadcast %10 : vector<1x128xf32> to vector<8x128xf32>
    %62 = arith.mulf %61, %60 : vector<8x128xf32>
    %63 = vector.broadcast %11 : vector<1x128xf32> to vector<8x128xf32>
    %64 = arith.addf %62, %63 : vector<8x128xf32>
    %65 = vector.extract_strided_slice %64 {offsets = [0, 0], sizes = [8, 32], strides = [1, 1]} : vector<8x128xf32> to vector<8x32xf32>
    %66 = vector.extract_strided_slice %64 {offsets = [0, 32], sizes = [8, 32], strides = [1, 1]} : vector<8x128xf32> to vector<8x32xf32>
    %67 = vector.extract_strided_slice %64 {offsets = [0, 64], sizes = [8, 32], strides = [1, 1]} : vector<8x128xf32> to vector<8x32xf32>
    %68 = vector.extract_strided_slice %64 {offsets = [0, 96], sizes = [8, 32], strides = [1, 1]} : vector<8x128xf32> to vector<8x32xf32>
    %69 = arith.mulf %66, %50 : vector<8x32xf32>
    %70 = arith.mulf %65, %67 : vector<8x32xf32>
    %71 = arith.addf %69, %70 : vector<8x32xf32>
    %72 = math.tanh %71 : vector<8x32xf32>
    %73 = arith.mulf %68, %72 : vector<8x32xf32>
    %74 = vector.extract_strided_slice %29 {offsets = [16, 0], sizes = [8, 128], strides = [1, 1]} : vector<56x128xf32> to vector<8x128xf32>
    %cst_25 = arith.constant dense<0.000000e+00> : vector<8x128xf32>
    %75 = tpu.matmul %73, %7, %cst_25 {dimension_numbers = #tpu.dot_dimension_numbers<[1], [0], [0], [1], [0, 0, 1, 1], [], []>} : vector<8x32xf32>, vector<32x128xf32>, vector<8x128xf32> -> vector<8x128xf32>
    %76 = arith.addf %74, %75 : vector<8x128xf32>
    %77 = arith.negf %76 : vector<8x128xf32>
    %78 = math.exp %77 : vector<8x128xf32>
    %cst_26 = arith.constant 1.000000e+00 : f32
    %79 = vector.broadcast %cst_26 : f32 to vector<8x128xf32>
    %80 = arith.addf %79, %78 : vector<8x128xf32>
    %81 = arith.divf %79, %80 : vector<8x128xf32>
    %82 = vector.broadcast %10 : vector<1x128xf32> to vector<8x128xf32>
    %83 = arith.mulf %82, %81 : vector<8x128xf32>
    %84 = vector.broadcast %11 : vector<1x128xf32> to vector<8x128xf32>
    %85 = arith.addf %83, %84 : vector<8x128xf32>
    %86 = vector.extract_strided_slice %85 {offsets = [0, 0], sizes = [8, 32], strides = [1, 1]} : vector<8x128xf32> to vector<8x32xf32>
    %87 = vector.extract_strided_slice %85 {offsets = [0, 32], sizes = [8, 32], strides = [1, 1]} : vector<8x128xf32> to vector<8x32xf32>
    %88 = vector.extract_strided_slice %85 {offsets = [0, 64], sizes = [8, 32], strides = [1, 1]} : vector<8x128xf32> to vector<8x32xf32>
    %89 = vector.extract_strided_slice %85 {offsets = [0, 96], sizes = [8, 32], strides = [1, 1]} : vector<8x128xf32> to vector<8x32xf32>
    %90 = arith.mulf %87, %71 : vector<8x32xf32>
    %91 = arith.mulf %86, %88 : vector<8x32xf32>
    %92 = arith.addf %90, %91 : vector<8x32xf32>
    %93 = math.tanh %92 : vector<8x32xf32>
    %94 = arith.mulf %89, %93 : vector<8x32xf32>
    %95 = vector.extract_strided_slice %29 {offsets = [24, 0], sizes = [8, 128], strides = [1, 1]} : vector<56x128xf32> to vector<8x128xf32>
    %cst_27 = arith.constant dense<0.000000e+00> : vector<8x128xf32>
    %96 = tpu.matmul %94, %7, %cst_27 {dimension_numbers = #tpu.dot_dimension_numbers<[1], [0], [0], [1], [0, 0, 1, 1], [], []>} : vector<8x32xf32>, vector<32x128xf32>, vector<8x128xf32> -> vector<8x128xf32>
    %97 = arith.addf %95, %96 : vector<8x128xf32>
    %98 = arith.negf %97 : vector<8x128xf32>
    %99 = math.exp %98 : vector<8x128xf32>
    %cst_28 = arith.constant 1.000000e+00 : f32
    %100 = vector.broadcast %cst_28 : f32 to vector<8x128xf32>
    %101 = arith.addf %100, %99 : vector<8x128xf32>
    %102 = arith.divf %100, %101 : vector<8x128xf32>
    %103 = vector.broadcast %10 : vector<1x128xf32> to vector<8x128xf32>
    %104 = arith.mulf %103, %102 : vector<8x128xf32>
    %105 = vector.broadcast %11 : vector<1x128xf32> to vector<8x128xf32>
    %106 = arith.addf %104, %105 : vector<8x128xf32>
    %107 = vector.extract_strided_slice %106 {offsets = [0, 0], sizes = [8, 32], strides = [1, 1]} : vector<8x128xf32> to vector<8x32xf32>
    %108 = vector.extract_strided_slice %106 {offsets = [0, 32], sizes = [8, 32], strides = [1, 1]} : vector<8x128xf32> to vector<8x32xf32>
    %109 = vector.extract_strided_slice %106 {offsets = [0, 64], sizes = [8, 32], strides = [1, 1]} : vector<8x128xf32> to vector<8x32xf32>
    %110 = vector.extract_strided_slice %106 {offsets = [0, 96], sizes = [8, 32], strides = [1, 1]} : vector<8x128xf32> to vector<8x32xf32>
    %111 = arith.mulf %108, %92 : vector<8x32xf32>
    %112 = arith.mulf %107, %109 : vector<8x32xf32>
    %113 = arith.addf %111, %112 : vector<8x32xf32>
    %114 = math.tanh %113 : vector<8x32xf32>
    %115 = arith.mulf %110, %114 : vector<8x32xf32>
    %116 = vector.extract_strided_slice %29 {offsets = [32, 0], sizes = [8, 128], strides = [1, 1]} : vector<56x128xf32> to vector<8x128xf32>
    %cst_29 = arith.constant dense<0.000000e+00> : vector<8x128xf32>
    %117 = tpu.matmul %115, %7, %cst_29 {dimension_numbers = #tpu.dot_dimension_numbers<[1], [0], [0], [1], [0, 0, 1, 1], [], []>} : vector<8x32xf32>, vector<32x128xf32>, vector<8x128xf32> -> vector<8x128xf32>
    %118 = arith.addf %116, %117 : vector<8x128xf32>
    %119 = arith.negf %118 : vector<8x128xf32>
    %120 = math.exp %119 : vector<8x128xf32>
    %cst_30 = arith.constant 1.000000e+00 : f32
    %121 = vector.broadcast %cst_30 : f32 to vector<8x128xf32>
    %122 = arith.addf %121, %120 : vector<8x128xf32>
    %123 = arith.divf %121, %122 : vector<8x128xf32>
    %124 = vector.broadcast %10 : vector<1x128xf32> to vector<8x128xf32>
    %125 = arith.mulf %124, %123 : vector<8x128xf32>
    %126 = vector.broadcast %11 : vector<1x128xf32> to vector<8x128xf32>
    %127 = arith.addf %125, %126 : vector<8x128xf32>
    %128 = vector.extract_strided_slice %127 {offsets = [0, 0], sizes = [8, 32], strides = [1, 1]} : vector<8x128xf32> to vector<8x32xf32>
    %129 = vector.extract_strided_slice %127 {offsets = [0, 32], sizes = [8, 32], strides = [1, 1]} : vector<8x128xf32> to vector<8x32xf32>
    %130 = vector.extract_strided_slice %127 {offsets = [0, 64], sizes = [8, 32], strides = [1, 1]} : vector<8x128xf32> to vector<8x32xf32>
    %131 = vector.extract_strided_slice %127 {offsets = [0, 96], sizes = [8, 32], strides = [1, 1]} : vector<8x128xf32> to vector<8x32xf32>
    %132 = arith.mulf %129, %113 : vector<8x32xf32>
    %133 = arith.mulf %128, %130 : vector<8x32xf32>
    %134 = arith.addf %132, %133 : vector<8x32xf32>
    %135 = math.tanh %134 : vector<8x32xf32>
    %136 = arith.mulf %131, %135 : vector<8x32xf32>
    %137 = vector.extract_strided_slice %29 {offsets = [40, 0], sizes = [8, 128], strides = [1, 1]} : vector<56x128xf32> to vector<8x128xf32>
    %cst_31 = arith.constant dense<0.000000e+00> : vector<8x128xf32>
    %138 = tpu.matmul %136, %7, %cst_31 {dimension_numbers = #tpu.dot_dimension_numbers<[1], [0], [0], [1], [0, 0, 1, 1], [], []>} : vector<8x32xf32>, vector<32x128xf32>, vector<8x128xf32> -> vector<8x128xf32>
    %139 = arith.addf %137, %138 : vector<8x128xf32>
    %140 = arith.negf %139 : vector<8x128xf32>
    %141 = math.exp %140 : vector<8x128xf32>
    %cst_32 = arith.constant 1.000000e+00 : f32
    %142 = vector.broadcast %cst_32 : f32 to vector<8x128xf32>
    %143 = arith.addf %142, %141 : vector<8x128xf32>
    %144 = arith.divf %142, %143 : vector<8x128xf32>
    %145 = vector.broadcast %10 : vector<1x128xf32> to vector<8x128xf32>
    %146 = arith.mulf %145, %144 : vector<8x128xf32>
    %147 = vector.broadcast %11 : vector<1x128xf32> to vector<8x128xf32>
    %148 = arith.addf %146, %147 : vector<8x128xf32>
    %149 = vector.extract_strided_slice %148 {offsets = [0, 0], sizes = [8, 32], strides = [1, 1]} : vector<8x128xf32> to vector<8x32xf32>
    %150 = vector.extract_strided_slice %148 {offsets = [0, 32], sizes = [8, 32], strides = [1, 1]} : vector<8x128xf32> to vector<8x32xf32>
    %151 = vector.extract_strided_slice %148 {offsets = [0, 64], sizes = [8, 32], strides = [1, 1]} : vector<8x128xf32> to vector<8x32xf32>
    %152 = vector.extract_strided_slice %148 {offsets = [0, 96], sizes = [8, 32], strides = [1, 1]} : vector<8x128xf32> to vector<8x32xf32>
    %153 = arith.mulf %150, %134 : vector<8x32xf32>
    %154 = arith.mulf %149, %151 : vector<8x32xf32>
    %155 = arith.addf %153, %154 : vector<8x32xf32>
    %156 = math.tanh %155 : vector<8x32xf32>
    %157 = arith.mulf %152, %156 : vector<8x32xf32>
    %158 = vector.extract_strided_slice %29 {offsets = [48, 0], sizes = [8, 128], strides = [1, 1]} : vector<56x128xf32> to vector<8x128xf32>
    %cst_33 = arith.constant dense<0.000000e+00> : vector<8x128xf32>
    %159 = tpu.matmul %157, %7, %cst_33 {dimension_numbers = #tpu.dot_dimension_numbers<[1], [0], [0], [1], [0, 0, 1, 1], [], []>} : vector<8x32xf32>, vector<32x128xf32>, vector<8x128xf32> -> vector<8x128xf32>
    %160 = arith.addf %158, %159 : vector<8x128xf32>
    %161 = arith.negf %160 : vector<8x128xf32>
    %162 = math.exp %161 : vector<8x128xf32>
    %cst_34 = arith.constant 1.000000e+00 : f32
    %163 = vector.broadcast %cst_34 : f32 to vector<8x128xf32>
    %164 = arith.addf %163, %162 : vector<8x128xf32>
    %165 = arith.divf %163, %164 : vector<8x128xf32>
    %166 = vector.broadcast %10 : vector<1x128xf32> to vector<8x128xf32>
    %167 = arith.mulf %166, %165 : vector<8x128xf32>
    %168 = vector.broadcast %11 : vector<1x128xf32> to vector<8x128xf32>
    %169 = arith.addf %167, %168 : vector<8x128xf32>
    %170 = vector.extract_strided_slice %169 {offsets = [0, 0], sizes = [8, 32], strides = [1, 1]} : vector<8x128xf32> to vector<8x32xf32>
    %171 = vector.extract_strided_slice %169 {offsets = [0, 32], sizes = [8, 32], strides = [1, 1]} : vector<8x128xf32> to vector<8x32xf32>
    %172 = vector.extract_strided_slice %169 {offsets = [0, 64], sizes = [8, 32], strides = [1, 1]} : vector<8x128xf32> to vector<8x32xf32>
    %173 = vector.extract_strided_slice %169 {offsets = [0, 96], sizes = [8, 32], strides = [1, 1]} : vector<8x128xf32> to vector<8x32xf32>
    %174 = arith.mulf %171, %155 : vector<8x32xf32>
    %175 = arith.mulf %170, %172 : vector<8x32xf32>
    %176 = arith.addf %174, %175 : vector<8x32xf32>
    %177 = math.tanh %176 : vector<8x32xf32>
    %178 = arith.mulf %173, %177 : vector<8x32xf32>
    %cst_35 = arith.constant dense<0.000000e+00> : vector<8x32xf32>
    %179 = tpu.matmul %178, %12, %cst_35 {dimension_numbers = #tpu.dot_dimension_numbers<[1], [0], [0], [1], [0, 0, 1, 1], [], []>} : vector<8x32xf32>, vector<32x32xf32>, vector<8x32xf32> -> vector<8x32xf32>
    %180 = vector.broadcast %5 : vector<8x1xf32> to vector<8x32xf32>
    %181 = vector.broadcast %13 : vector<1x32xf32> to vector<8x32xf32>
    %182 = arith.mulf %180, %181 : vector<8x32xf32>
    %183 = arith.addf %179, %182 : vector<8x32xf32>
    %184 = vector.broadcast %14 : vector<1x32xf32> to vector<8x32xf32>
    %185 = arith.addf %183, %184 : vector<8x32xf32>
    %186 = math.tanh %185 : vector<8x32xf32>
    %187 = arith.mulf %186, %186 : vector<8x32xf32>
    %cst_36 = arith.constant 1.000000e+00 : f32
    %188 = vector.broadcast %cst_36 : f32 to vector<8x32xf32>
    %189 = arith.subf %188, %187 : vector<8x32xf32>
    %190 = vector.broadcast %13 : vector<1x32xf32> to vector<8x32xf32>
    %191 = arith.mulf %189, %190 : vector<8x32xf32>
    %c88 = arith.constant 88 : index
    %c0_37 = arith.constant 0 : index
    %192 = vector.load %arg1[%c88, %c0_37] : memref<128x128xf32, #tpu.memory_space<vmem>>, vector<32x32xf32>
    %c122 = arith.constant 122 : index
    %c0_38 = arith.constant 0 : index
    %193 = vector.load %arg1[%c122, %c0_38] : memref<128x128xf32, #tpu.memory_space<vmem>>, vector<1x32xf32>
    %194 = tpu.concatenate %186, %191 in 0 : vector<8x32xf32>, vector<8x32xf32> -> vector<16x32xf32>
    %cst_39 = arith.constant dense<0.000000e+00> : vector<16x32xf32>
    %195 = tpu.matmul %194, %192, %cst_39 {dimension_numbers = #tpu.dot_dimension_numbers<[1], [0], [0], [1], [0, 0, 1, 1], [], []>} : vector<16x32xf32>, vector<32x32xf32>, vector<16x32xf32> -> vector<16x32xf32>
    %196 = vector.extract_strided_slice %195 {offsets = [0, 0], sizes = [8, 32], strides = [1, 1]} : vector<16x32xf32> to vector<8x32xf32>
    %197 = vector.broadcast %193 : vector<1x32xf32> to vector<8x32xf32>
    %198 = arith.addf %196, %197 : vector<8x32xf32>
    %199 = math.tanh %198 : vector<8x32xf32>
    %200 = arith.mulf %199, %199 : vector<8x32xf32>
    %cst_40 = arith.constant 1.000000e+00 : f32
    %201 = vector.broadcast %cst_40 : f32 to vector<8x32xf32>
    %202 = arith.subf %201, %200 : vector<8x32xf32>
    %203 = vector.extract_strided_slice %195 {offsets = [8, 0], sizes = [8, 32], strides = [1, 1]} : vector<16x32xf32> to vector<8x32xf32>
    %204 = arith.mulf %202, %203 : vector<8x32xf32>
    %205 = tpu.concatenate %199, %204 in 0 : vector<8x32xf32>, vector<8x32xf32> -> vector<16x32xf32>
    %206 = vector.broadcast %15 : vector<1x32xf32> to vector<16x32xf32>
    %207 = arith.mulf %205, %206 : vector<16x32xf32>
    %cst_41 = arith.constant dense<0.000000e+00> : vector<16xf32>
    %208 = vector.multi_reduction <add>, %207, %cst_41 [1] : vector<16x32xf32> to vector<16xf32>
    %209 = vector.shape_cast %208 : vector<16xf32> to vector<16x1xf32>
    %210 = vector.extract_strided_slice %209 {offsets = [0, 0], sizes = [8, 1], strides = [1, 1]} : vector<16x1xf32> to vector<8x1xf32>
    %211 = vector.broadcast %16 : vector<1x1xf32> to vector<8x1xf32>
    %212 = arith.addf %210, %211 : vector<8x1xf32>
    %213 = vector.extract_strided_slice %209 {offsets = [8, 0], sizes = [8, 1], strides = [1, 1]} : vector<16x1xf32> to vector<8x1xf32>
    %cst_42 = arith.constant 2.000000e+01 : f32
    %214 = vector.broadcast %cst_42 : f32 to vector<8x1xf32>
    %215 = arith.cmpf ogt, %212, %214 : vector<8x1xf32>
    %cst_43 = arith.constant 2.000000e+01 : f32
    %216 = vector.broadcast %cst_43 : f32 to vector<8x1xf32>
    %217 = arith.minimumf %212, %216 : vector<8x1xf32>
    %218 = math.exp %217 : vector<8x1xf32>
    %219 = math.log1p %218 : vector<8x1xf32>
    %220 = arith.select %215, %212, %219 : vector<8x1xi1>, vector<8x1xf32>
    %221 = arith.negf %212 : vector<8x1xf32>
    %222 = math.exp %221 : vector<8x1xf32>
    %cst_44 = arith.constant 1.000000e+00 : f32
    %223 = vector.broadcast %cst_44 : f32 to vector<8x1xf32>
    %224 = arith.addf %223, %222 : vector<8x1xf32>
    %225 = arith.divf %223, %224 : vector<8x1xf32>
    %226 = arith.mulf %225, %213 : vector<8x1xf32>
    %cst_45 = arith.constant 2.000000e+01 : f32
    %227 = vector.broadcast %cst_45 : f32 to vector<8x1xf32>
    %228 = arith.cmpf ogt, %220, %227 : vector<8x1xf32>
    %cst_46 = arith.constant 2.000000e+01 : f32
    %229 = vector.broadcast %cst_46 : f32 to vector<8x1xf32>
    %230 = arith.minimumf %220, %229 : vector<8x1xf32>
    %231 = math.exp %230 : vector<8x1xf32>
    %232 = math.log1p %231 : vector<8x1xf32>
    %233 = arith.select %228, %220, %232 : vector<8x1xi1>, vector<8x1xf32>
    %234 = arith.negf %220 : vector<8x1xf32>
    %235 = math.exp %234 : vector<8x1xf32>
    %cst_47 = arith.constant 1.000000e+00 : f32
    %236 = vector.broadcast %cst_47 : f32 to vector<8x1xf32>
    %237 = arith.addf %236, %235 : vector<8x1xf32>
    %238 = arith.divf %236, %237 : vector<8x1xf32>
    %239 = arith.mulf %238, %226 : vector<8x1xf32>
    %cst_48 = arith.constant 1.250000e-01 : f32
    %240 = vector.broadcast %cst_48 : f32 to vector<8x1xf32>
    %241 = arith.mulf %239, %240 : vector<8x1xf32>
    %242 = vector.shape_cast %233 : vector<8x1xf32> to vector<1x8x1xf32>
    %cst_49 = arith.constant dense<0.000000e+00> : vector<1xf32>
    %243 = vector.multi_reduction <add>, %242, %cst_49 [1, 2] : vector<1x8x1xf32> to vector<1xf32>
    %244 = vector.shape_cast %243 : vector<1xf32> to vector<1x1x1xf32>
    %245 = vector.extract %244[0, 0, 0] : f32 from vector<1x1x1xf32>
    %246 = vector.broadcast %245 : f32 to vector<1x1xf32>
    %cst_50 = arith.constant 8.000000e+00 : f32
    %247 = vector.broadcast %cst_50 : f32 to vector<1x1xf32>
    %248 = arith.divf %246, %247 : vector<1x1xf32>
    %cst_51 = arith.constant 1.000000e-10 : f32
    %249 = vector.broadcast %cst_51 : f32 to vector<8x1xf32>
    %250 = arith.addf %241, %249 : vector<8x1xf32>
    %251 = math.log %250 : vector<8x1xf32>
    %252 = vector.shape_cast %251 : vector<8x1xf32> to vector<1x8x1xf32>
    %cst_52 = arith.constant dense<0.000000e+00> : vector<1xf32>
    %253 = vector.multi_reduction <add>, %252, %cst_52 [1, 2] : vector<1x8x1xf32> to vector<1xf32>
    %254 = vector.shape_cast %253 : vector<1xf32> to vector<1x1x1xf32>
    %255 = vector.extract %254[0, 0, 0] : f32 from vector<1x1x1xf32>
    %256 = vector.broadcast %255 : f32 to vector<1x1xf32>
    %cst_53 = arith.constant 8.000000e+00 : f32
    %257 = vector.broadcast %cst_53 : f32 to vector<1x1xf32>
    %258 = arith.divf %256, %257 : vector<1x1xf32>
    %259 = arith.subf %248, %258 : vector<1x1xf32>
    %260 = tpu.iota {dimensions = array<i32: 1>} : vector<8x128xi32>
    %c0_i32 = arith.constant 0 : i32
    %261 = vector.broadcast %c0_i32 : i32 to vector<8x128xi32>
    %262 = arith.cmpi eq, %260, %261 : vector<8x128xi32>
    %cst_54 = arith.constant 0.000000e+00 : f32
    %263 = vector.shape_cast %259 : vector<1x1xf32> to vector<1x1xf32>
    %264 = vector.broadcast %263 : vector<1x1xf32> to vector<8x128xf32>
    %265 = vector.broadcast %cst_54 : f32 to vector<8x128xf32>
    %266 = arith.select %262, %264, %265 : vector<8x128xi1>, vector<8x128xf32>
    %c1_i32 = arith.constant 1 : i32
    %267 = vector.broadcast %c1_i32 : i32 to vector<8x128xi32>
    %268 = arith.cmpi eq, %260, %267 : vector<8x128xi32>
    %cst_55 = arith.constant 0.000000e+00 : f32
    %269 = vector.shape_cast %258 : vector<1x1xf32> to vector<1x1xf32>
    %270 = vector.broadcast %269 : vector<1x1xf32> to vector<8x128xf32>
    %271 = vector.broadcast %cst_55 : f32 to vector<8x128xf32>
    %272 = arith.select %268, %270, %271 : vector<8x128xi1>, vector<8x128xf32>
    %273 = arith.addf %266, %272 : vector<8x128xf32>
    %c2_i32 = arith.constant 2 : i32
    %274 = vector.broadcast %c2_i32 : i32 to vector<8x128xi32>
    %275 = arith.cmpi eq, %260, %274 : vector<8x128xi32>
    %cst_56 = arith.constant 0.000000e+00 : f32
    %276 = vector.shape_cast %248 : vector<1x1xf32> to vector<1x1xf32>
    %277 = vector.broadcast %276 : vector<1x1xf32> to vector<8x128xf32>
    %278 = vector.broadcast %cst_56 : f32 to vector<8x128xf32>
    %279 = arith.select %275, %277, %278 : vector<8x128xi1>, vector<8x128xf32>
    %280 = arith.addf %273, %279 : vector<8x128xf32>
    %c4_i32 = arith.constant 4 : i32
    %281 = vector.broadcast %c4_i32 : i32 to vector<8x128xi32>
    %282 = arith.cmpi eq, %260, %281 : vector<8x128xi32>
    %283 = vector.shape_cast %241 : vector<8x1xf32> to vector<8x1xf32>
    %284 = vector.broadcast %283 : vector<8x1xf32> to vector<8x128xf32>
    %285 = arith.select %282, %284, %280 : vector<8x128xi1>, vector<8x128xf32>
    %c0_57 = arith.constant 0 : index
    %c0_58 = arith.constant 0 : index
    %c0_59 = arith.constant 0 : index
    %286 = vector.load %arg3[%c0_57, %c0_58, %c0_59] : memref<1x8x128xf32, #tpu.memory_space<vmem>>, vector<1x8x128xf32>
    %287 = vector.shape_cast %286 : vector<1x8x128xf32> to vector<8x128xf32>
    %288 = vector.shape_cast %285 : vector<8x128xf32> to vector<1x8x128xf32>
    tpu.vector_store %arg3[%c0_57, %c0_58, %c0_59], %288 {strides = array<i32>} : memref<1x8x128xf32, #tpu.memory_space<vmem>>, vector<1x8x128xf32>,
    return
  }
  func.func @transform_0(%arg0: i32) -> (i32, i32) {
    %c0_i32 = arith.constant 0 : i32
    %c0_i32_0 = arith.constant 0 : i32
    %c0_i32_1 = arith.constant 0 : i32
    return %c0_i32, %c0_i32_0 : i32, i32
  }
  func.func @transform_1(%arg0: i32) -> (i32, i32, i32) {
    %c0_i32 = arith.constant 0 : i32
    %c0_i32_0 = arith.constant 0 : i32
    %c0_i32_1 = arith.constant 0 : i32
    return %arg0, %c0_i32, %c0_i32_0 : i32, i32, i32
  }
  func.func @transform_2(%arg0: i32) -> (i32, i32, i32) {
    %c0_i32 = arith.constant 0 : i32
    %c0_i32_0 = arith.constant 0 : i32
    %c0_i32_1 = arith.constant 0 : i32
    return %arg0, %c0_i32, %c0_i32_0 : i32, i32, i32
  }
}

</mosaic_0001>

<llo_original>
// kernel: gtpp_forward.1
$region0: #{gtpp_forward.1}
  #allocation0 [shape = 'u32[]', space=smem, size = 0x4, offset = 0x4, fixed_abs, tag = 'smem constant byte address 0x4 - core index']
  #allocation1 [shape = 'u32[72,128]{1,0:T(1,128)}', space=vmem, size = 0x9000, scoped, tag = 'internal scratch']
  %s0 = inlined_call_operand.vmem [shape: f32[128,128], index: 0, kind: input, shape index: {}]
  %s1 = inlined_call_operand.vmem [shape: f32[1,64,2], index: 1, kind: input, shape index: {}]
  %s2 = inlined_call_operand.vmem [shape: f32[1,8,128], index: 2, kind: output, shape index: {}]
  %s3 = sld [smem:[#allocation0]]
  $region18: #{gtpp_forward.1} parent=0
    _
  %s5 = ssub.s32 1, %s3
  %s6 = scalar_select 0, %s5, %s3
  // Predicated region
  $region2: #{gtpp_forward.1} parent=0 // pred_check
    _
  $region3: #{gtpp_forward.1} parent=0 // pred_check_branch
    %8 = sbr.rel (0) target = $region5
  $region4: #{gtpp_forward.1} parent=0 // pred_region
    _
  $region5: #{gtpp_forward.1} parent=0 // pred_fallthru
    _
  // Predicated region
  $region6: #{gtpp_forward.1} parent=0 // pred_check
    _
  $region7: #{gtpp_forward.1} parent=0 // pred_check_branch
    %10 = sbr.rel (0) target = $region9
  $region8: #{gtpp_forward.1} parent=0 // pred_region
    _
  $region9: #{gtpp_forward.1} parent=0 // pred_fallthru
    _
  %v11 = vld [vmem:[%s1] sm:$0xff]
  %v12 = vld [vmem:[%s1 + $0x8] sm:$0xff]
  %v13 = vld [vmem:[%s1 + $0x10] sm:$0xff]
  %v14 = vld [vmem:[%s1 + $0x18] sm:$0xff]
  %v15 = vld [vmem:[%s1 + $0x20] sm:$0xff]
  %v16 = vld [vmem:[%s1 + $0x28] sm:$0xff]
  %v17 = vld [vmem:[%s1 + $0x30] sm:$0xff]
  %v18 = vld [vmem:[%s1 + $0x38] sm:$0xff]
  %v19 = vld [vmem:[%s0] sm:$0xff]
  %v20 = vld [vmem:[%s0 + $0x8] sm:$0xff]
  %v21 = vld [vmem:[%s0 + $0x10] sm:$0xff]
  %v22 = vld [vmem:[%s0 + $0x18] sm:$0xff]
  %v23 = vld [vmem:[%s0 + $0x20] sm:$0xff]
  %v24 = vld [vmem:[%s0 + $0x28] sm:$0xff]
  %v25 = vld [vmem:[%s0 + $0x30] sm:$0x1]
  %v26 = vld [vmem:[%s0 + $0x31] sm:$0x1]
  %v27 = vld [vmem:[%s0 + $0x32] sm:$0x1]
  %v28 = vld [vmem:[%s0 + $0x33] sm:$0x1]
  %v29 = vld [vmem:[%s0 + $0x38] sm:$0xff]
  %v30 = vld [vmem:[%s0 + $0x40] sm:$0xff]
  %v31 = vld [vmem:[%s0 + $0x48] sm:$0xff]
  %v32 = vld [vmem:[%s0 + $0x50] sm:$0xff]
  %v33 = vld [vmem:[%s0 + $0x78] sm:$0x1]
  %v34 = vld [vmem:[%s0 + $0x79] sm:$0x1]
  %v35 = vld [vmem:[%s0 + $0x7b] sm:$0x1]
  %v36 = vld [vmem:[%s0 + $0x7c] sm:$0x1]
  %v37 = vlaneseq
  %v38 = vand.u32 %v37, 127
  %v39 = vcvt.f32.s32.to.zero.pseudo %v11
  %v40 = vcvt.f32.s32.to.zero.pseudo %v12
  %v41 = vcvt.f32.s32.to.zero.pseudo %v13
  %v42 = vcvt.f32.s32.to.zero.pseudo %v14
  %v43 = vcvt.f32.s32.to.zero.pseudo %v15
  %v44 = vcvt.f32.s32.to.zero.pseudo %v16
  %v45 = vcvt.f32.s32.to.zero.pseudo %v17
  %46 = vset.pattern.permute.xlu0 0
  %47 = vperm.xlu0 %46, %v39
  %v48 = vpop.permute.xlu0 %47
  %49 = vset.pattern.permute.xlu0 0
  %50 = vperm.xlu0 %49, %v40
  %v51 = vpop.permute.xlu0 %50
  %52 = vset.pattern.permute.xlu0 0
  %53 = vperm.xlu0 %52, %v41
  %v54 = vpop.permute.xlu0 %53
  %55 = vset.pattern.permute.xlu0 0
  %56 = vperm.xlu0 %55, %v42
  %v57 = vpop.permute.xlu0 %56
  %58 = vset.pattern.permute.xlu0 0
  %59 = vperm.xlu0 %58, %v43
  %v60 = vpop.permute.xlu0 %59
  %61 = vset.pattern.permute.xlu0 0
  %62 = vperm.xlu0 %61, %v44
  %v63 = vpop.permute.xlu0 %62
  %64 = vset.pattern.permute.xlu0 0
  %65 = vperm.xlu0 %64, %v45
  %v66 = vpop.permute.xlu0 %65
  %vm67 = vcmp.eq.s32.totalorder %v48, %v38
  %vm68 = vcmp.eq.s32.totalorder %v51, %v38
  %vm69 = vcmp.eq.s32.totalorder %v54, %v38
  %vm70 = vcmp.eq.s32.totalorder %v57, %v38
  %vm71 = vcmp.eq.s32.totalorder %v60, %v38
  %vm72 = vcmp.eq.s32.totalorder %v63, %v38
  %vm73 = vcmp.eq.s32.totalorder %v66, %v38
  %v74 = vsel %vm67, 1, 0
  %v75 = vsel %vm68, 1, 0
  %v76 = vsel %vm69, 1, 0
  %v77 = vsel %vm70, 1, 0
  %v78 = vsel %vm71, 1, 0
  %v79 = vsel %vm72, 1, 0
  %v80 = vsel %vm73, 1, 0
  %v81 = vcvt.s32.f32 %v74
  %v82 = vcvt.s32.f32 %v75
  %v83 = vcvt.s32.f32 %v76
  %v84 = vcvt.s32.f32 %v77
  %v85 = vcvt.s32.f32 %v78
  %v86 = vcvt.s32.f32 %v79
  %v87 = vcvt.s32.f32 %v80
  %89 = vset.pattern.permute.xlu0 1
  %90 = vperm.xlu0 %89, %v11
  %v91 = vpop.permute.xlu0 %90
  %94 = vset.pattern.permute.xlu0 1
  %95 = vperm.xlu0 %94, %v12
  %v96 = vpop.permute.xlu0 %95
  %99 = vset.pattern.permute.xlu0 1
  %100 = vperm.xlu0 %99, %v13
  %v101 = vpop.permute.xlu0 %100
  %104 = vset.pattern.permute.xlu0 1
  %105 = vperm.xlu0 %104, %v14
  %v106 = vpop.permute.xlu0 %105
  %109 = vset.pattern.permute.xlu0 1
  %110 = vperm.xlu0 %109, %v15
  %v111 = vpop.permute.xlu0 %110
  %114 = vset.pattern.permute.xlu0 1
  %115 = vperm.xlu0 %114, %v16
  %v116 = vpop.permute.xlu0 %115
  %119 = vset.pattern.permute.xlu0 1
  %120 = vperm.xlu0 %119, %v17
  %v121 = vpop.permute.xlu0 %120
  %v123 = vperm.slane %v26, 0
  %v124 = vmul.f32 %v91, %v123
  %v125 = vmul.f32 %v96, %v123
  %v126 = vmul.f32 %v101, %v123
  %v127 = vmul.f32 %v106, %v123
  %v128 = vmul.f32 %v111, %v123
  %v129 = vmul.f32 %v116, %v123
  %v130 = vmul.f32 %v121, %v123
  %vm131 = vcmask 130048
  %v133 = vsel %vm131, %v81, 0
  %v136 = vsel %vm131, %v82, 0
  %v139 = vsel %vm131, %v83, 0
  %v142 = vsel %vm131, %v84, 0
  %v145 = vsel %vm131, %v85, 0
  %v148 = vsel %vm131, %v86, 0
  %v151 = vsel %vm131, %v87, 0
  %153 = vmatpush.msra.mxu0 0.0
  %154 = vmatpush.msra.mxu0 0.0
  %155 = vmatpush.msra.mxu0 0.0
  %156 = vmatpush.msra.mxu0 0.0
  %157 = vmatpush.msra.mxu0 0.0
  %158 = vmatpush.msra.mxu0 0.0
  %159 = vmatpush.msra.mxu0 0.0
  %160 = vmatpush.msra.mxu0 0.0
  %161 = vmatpush.msra.mxu0 0.0
  %162 = vmatpush.msra.mxu0 0.0
  %163 = vmatpush.msra.mxu0 0.0
  %164 = vmatpush.msra.mxu0 0.0
  %165 = vmatpush.msra.mxu0 0.0
  %166 = vmatpush.msra.mxu0 0.0
  %167 = vmatpush.msra.mxu0 %v20
  %168 = vmatpush.msra.mxu0 %v19
  %169 = vmatmul.f32.gmra.mxu0 %v133
  %v170 = vpop.f32.mrf.mxu0
  %v171 = vadd.f32 %v124, %v170
  %172 = vmatmul.f32.gmra.mxu0 %v136
  %v173 = vpop.f32.mrf.mxu0
  %v174 = vadd.f32 %v125, %v173
  %175 = vmatmul.f32.gmra.mxu0 %v139
  %v176 = vpop.f32.mrf.mxu0
  %v177 = vadd.f32 %v126, %v176
  %178 = vmatmul.f32.gmra.mxu0 %v142
  %v179 = vpop.f32.mrf.mxu0
  %v180 = vadd.f32 %v127, %v179
  %181 = vmatmul.f32.gmra.mxu0 %v145
  %v182 = vpop.f32.mrf.mxu0
  %v183 = vadd.f32 %v128, %v182
  %184 = vmatmul.f32.gmra.mxu0 %v148
  %v185 = vpop.f32.mrf.mxu0
  %v186 = vadd.f32 %v129, %v185
  %187 = vmatmul.f32.gmra.mxu0 %v151
  %v188 = vpop.f32.mrf.mxu0
  %v189 = vadd.f32 %v130, %v188
  %190 = vdwg.mxu0
  %v191 = vperm.slane %v25, 0
  %v192 = vadd.f32 %v171, %v191
  %v193 = vadd.f32 %v174, %v191
  %v194 = vadd.f32 %v177, %v191
  %v195 = vadd.f32 %v180, %v191
  %v196 = vadd.f32 %v183, %v191
  %v197 = vadd.f32 %v186, %v191
  %v198 = vadd.f32 %v189, %v191
  %vm199 = vcmask 261120
  %v201 = vsel %vm199, 0.0, 0
  %203 = vmatpush.msra.mxu0 0.0
  %204 = vmatpush.msra.mxu0 0.0
  %205 = vmatpush.msra.mxu0 0.0
  %206 = vmatpush.msra.mxu0 0.0
  %207 = vmatpush.msra.mxu0 0.0
  %208 = vmatpush.msra.mxu0 0.0
  %209 = vmatpush.msra.mxu0 0.0
  %210 = vmatpush.msra.mxu0 0.0
  %211 = vmatpush.msra.mxu0 0.0
  %212 = vmatpush.msra.mxu0 0.0
  %213 = vmatpush.msra.mxu0 0.0
  %214 = vmatpush.msra.mxu0 0.0
  %215 = vmatpush.msra.mxu0 %v24
  %216 = vmatpush.msra.mxu0 %v23
  %217 = vmatpush.msra.mxu0 %v22
  %218 = vmatpush.msra.mxu0 %v21
  %219 = vmatmul.f32.gmra.mxu0 %v201
  %v220 = vpop.f32.mrf.mxu0
  %v221 = vadd.f32 0.0, %v220
  %222 = vdwg.mxu0
  %v223 = vadd.f32 %v192, %v221
  %v224 = vxor.u32 %v223, 2147483648
  %v225 = vmul.f32 %v224, 1.442695
  %v226 = vpow.pop %v225
  %v227 = vadd.f32 %v226, 1.0
  %v228 = vrcp.pop %v227
  %v229 = vmul.f32 %v227, %v228
  %v230 = vsub.f32 1.0, %v229
  %v231 = vmul.f32 %v228, %v230
  %v232 = vadd.f32 %v228, %v231
  %vm233 = vweird.f32 %v227
  %vm234 = vweird.f32 %v228
  %vm235 = vmor %vm233, %vm234
  %v236 = vsel %vm235, %v228, %v232
  %v237 = vand.u32 2147483647, %v227
  %vm238 = vcmp.eq.f32.partialorder %v237, 8.507059e+37
  %v239 = vand.u32 %v227, 2147483648
  %v240 = vor.u32 1.1754944e-38, %v239
  %v241 = vsel %vm238, %v240, %v236
  %v242 = vmul.f32 1.0, %v241
  %v243 = vperm.slane %v27, 0
  %v244 = vmul.f32 %v243, %v242
  %v245 = vperm.slane %v28, 0
  %v246 = vadd.f32 %v244, %v245
  %v247 = vmul.f32 %v246, 0.0
  %249 = vrot.lane.b32.xlu0 %v246, 64
  %v250 = vpop.permute.xlu0 %249
  %v252 = vmul.f32 %v246, %v250
  %254 = vrot.lane.b32.xlu0 %v252, 32
  %v255 = vpop.permute.xlu0 %254
  %v257 = vadd.f32 %v247, %v255
  %v258 = vtanh.pop %v257
  %260 = vrot.lane.b32.xlu0 %v258, 64
  %v261 = vpop.permute.xlu0 %260
  %v263 = vmul.f32 %v246, %v261
  %265 = vrot.lane.b32.xlu0 %v263, 32
  %v266 = vpop.permute.xlu0 %265
  %v267 = vsel %vm199, %v266, 0
  %269 = vmatpush.msra.mxu0 0.0
  %270 = vmatpush.msra.mxu0 0.0
  %271 = vmatpush.msra.mxu0 0.0
  %272 = vmatpush.msra.mxu0 0.0
  %273 = vmatpush.msra.mxu0 0.0
  %274 = vmatpush.msra.mxu0 0.0
  %275 = vmatpush.msra.mxu0 0.0
  %276 = vmatpush.msra.mxu0 0.0
  %277 = vmatpush.msra.mxu0 0.0
  %278 = vmatpush.msra.mxu0 0.0
  %279 = vmatpush.msra.mxu0 0.0
  %280 = vmatpush.msra.mxu0 0.0
  %281 = vmatpush.msra.mxu0 %v24
  %282 = vmatpush.msra.mxu0 %v23
  %283 = vmatpush.msra.mxu0 %v22
  %284 = vmatpush.msra.mxu0 %v21
  %285 = vmatmul.f32.gmra.mxu0 %v267
  %v286 = vpop.f32.mrf.mxu0
  %v287 = vadd.f32 0.0, %v286
  %288 = vdwg.mxu0
  %v289 = vadd.f32 %v193, %v287
  %v290 = vxor.u32 %v289, 2147483648
  %v291 = vmul.f32 %v290, 1.442695
  %v292 = vpow.pop %v291
  %v293 = vadd.f32 %v292, 1.0
  %v294 = vrcp.pop %v293
  %v295 = vmul.f32 %v293, %v294
  %v296 = vsub.f32 1.0, %v295
  %v297 = vmul.f32 %v294, %v296
  %v298 = vadd.f32 %v294, %v297
  %vm299 = vweird.f32 %v293
  %vm300 = vweird.f32 %v294
  %vm301 = vmor %vm299, %vm300
  %v302 = vsel %vm301, %v294, %v298
  %v303 = vand.u32 2147483647, %v293
  %vm304 = vcmp.eq.f32.partialorder %v303, 8.507059e+37
  %v305 = vand.u32 %v293, 2147483648
  %v306 = vor.u32 1.1754944e-38, %v305
  %v307 = vsel %vm304, %v306, %v302
  %v308 = vmul.f32 1.0, %v307
  %v309 = vmul.f32 %v243, %v308
  %v310 = vadd.f32 %v309, %v245
  %v311 = vmul.f32 %v310, %v257
  %313 = vrot.lane.b32.xlu0 %v310, 64
  %v314 = vpop.permute.xlu0 %313
  %v316 = vmul.f32 %v310, %v314
  %318 = vrot.lane.b32.xlu0 %v316, 32
  %v319 = vpop.permute.xlu0 %318
  %v321 = vadd.f32 %v311, %v319
  %v322 = vtanh.pop %v321
  %324 = vrot.lane.b32.xlu0 %v322, 64
  %v325 = vpop.permute.xlu0 %324
  %v327 = vmul.f32 %v310, %v325
  %329 = vrot.lane.b32.xlu0 %v327, 32
  %v330 = vpop.permute.xlu0 %329
  %v331 = vsel %vm199, %v330, 0
  %333 = vmatpush.msra.mxu0 0.0
  %334 = vmatpush.msra.mxu0 0.0
  %335 = vmatpush.msra.mxu0 0.0
  %336 = vmatpush.msra.mxu0 0.0
  %337 = vmatpush.msra.mxu0 0.0
  %338 = vmatpush.msra.mxu0 0.0
  %339 = vmatpush.msra.mxu0 0.0
  %340 = vmatpush.msra.mxu0 0.0
  %341 = vmatpush.msra.mxu0 0.0
  %342 = vmatpush.msra.mxu0 0.0
  %343 = vmatpush.msra.mxu0 0.0
  %344 = vmatpush.msra.mxu0 0.0
  %345 = vmatpush.msra.mxu0 %v24
  %346 = vmatpush.msra.mxu0 %v23
  %347 = vmatpush.msra.mxu0 %v22
  %348 = vmatpush.msra.mxu0 %v21
  %349 = vmatmul.f32.gmra.mxu0 %v331
  %v350 = vpop.f32.mrf.mxu0
  %v351 = vadd.f32 0.0, %v350
  %352 = vdwg.mxu0
  %v353 = vadd.f32 %v194, %v351
  %v354 = vxor.u32 %v353, 2147483648
  %v355 = vmul.f32 %v354, 1.442695
  %v356 = vpow.pop %v355
  %v357 = vadd.f32 %v356, 1.0
  %v358 = vrcp.pop %v357
  %v359 = vmul.f32 %v357, %v358
  %v360 = vsub.f32 1.0, %v359
  %v361 = vmul.f32 %v358, %v360
  %v362 = vadd.f32 %v358, %v361
  %vm363 = vweird.f32 %v357
  %vm364 = vweird.f32 %v358
  %vm365 = vmor %vm363, %vm364
  %v366 = vsel %vm365, %v358, %v362
  %v367 = vand.u32 2147483647, %v357
  %vm368 = vcmp.eq.f32.partialorder %v367, 8.507059e+37
  %v369 = vand.u32 %v357, 2147483648
  %v370 = vor.u32 1.1754944e-38, %v369
  %v371 = vsel %vm368, %v370, %v366
  %v372 = vmul.f32 1.0, %v371
  %v373 = vmul.f32 %v243, %v372
  %v374 = vadd.f32 %v373, %v245
  %v375 = vmul.f32 %v374, %v321
  %377 = vrot.lane.b32.xlu0 %v374, 64
  %v378 = vpop.permute.xlu0 %377
  %v380 = vmul.f32 %v374, %v378
  %382 = vrot.lane.b32.xlu0 %v380, 32
  %v383 = vpop.permute.xlu0 %382
  %v385 = vadd.f32 %v375, %v383
  %v386 = vtanh.pop %v385
  %388 = vrot.lane.b32.xlu0 %v386, 64
  %v389 = vpop.permute.xlu0 %388
  %v391 = vmul.f32 %v374, %v389
  %393 = vrot.lane.b32.xlu0 %v391, 32
  %v394 = vpop.permute.xlu0 %393
  %v395 = vsel %vm199, %v394, 0
  %397 = vmatpush.msra.mxu0 0.0
  %398 = vmatpush.msra.mxu0 0.0
  %399 = vmatpush.msra.mxu0 0.0
  %400 = vmatpush.msra.mxu0 0.0
  %401 = vmatpush.msra.mxu0 0.0
  %402 = vmatpush.msra.mxu0 0.0
  %403 = vmatpush.msra.mxu0 0.0
  %404 = vmatpush.msra.mxu0 0.0
  %405 = vmatpush.msra.mxu0 0.0
  %406 = vmatpush.msra.mxu0 0.0
  %407 = vmatpush.msra.mxu0 0.0
  %408 = vmatpush.msra.mxu0 0.0
  %409 = vmatpush.msra.mxu0 %v24
  %410 = vmatpush.msra.mxu0 %v23
  %411 = vmatpush.msra.mxu0 %v22
  %412 = vmatpush.msra.mxu0 %v21
  %413 = vmatmul.f32.gmra.mxu0 %v395
  %v414 = vpop.f32.mrf.mxu0
  %v415 = vadd.f32 0.0, %v414
  %416 = vdwg.mxu0
  %v417 = vadd.f32 %v195, %v415
  %v418 = vxor.u32 %v417, 2147483648
  %v419 = vmul.f32 %v418, 1.442695
  %v420 = vpow.pop %v419
  %v421 = vadd.f32 %v420, 1.0
  %v422 = vrcp.pop %v421
  %v423 = vmul.f32 %v421, %v422
  %v424 = vsub.f32 1.0, %v423
  %v425 = vmul.f32 %v422, %v424
  %v426 = vadd.f32 %v422, %v425
  %vm427 = vweird.f32 %v421
  %vm428 = vweird.f32 %v422
  %vm429 = vmor %vm427, %vm428
  %v430 = vsel %vm429, %v422, %v426
  %v431 = vand.u32 2147483647, %v421
  %vm432 = vcmp.eq.f32.partialorder %v431, 8.507059e+37
  %v433 = vand.u32 %v421, 2147483648
  %v434 = vor.u32 1.1754944e-38, %v433
  %v435 = vsel %vm432, %v434, %v430
  %v436 = vmul.f32 1.0, %v435
  %v437 = vmul.f32 %v243, %v436
  %v438 = vadd.f32 %v437, %v245
  %v439 = vmul.f32 %v438, %v385
  %441 = vrot.lane.b32.xlu0 %v438, 64
  %v442 = vpop.permute.xlu0 %441
  %v444 = vmul.f32 %v438, %v442
  %446 = vrot.lane.b32.xlu0 %v444, 32
  %v447 = vpop.permute.xlu0 %446
  %v449 = vadd.f32 %v439, %v447
  %v450 = vtanh.pop %v449
  %452 = vrot.lane.b32.xlu0 %v450, 64
  %v453 = vpop.permute.xlu0 %452
  %v455 = vmul.f32 %v438, %v453
  %457 = vrot.lane.b32.xlu0 %v455, 32
  %v458 = vpop.permute.xlu0 %457
  %v459 = vsel %vm199, %v458, 0
  %461 = vmatpush.msra.mxu0 0.0
  %462 = vmatpush.msra.mxu0 0.0
  %463 = vmatpush.msra.mxu0 0.0
  %464 = vmatpush.msra.mxu0 0.0
  %465 = vmatpush.msra.mxu0 0.0
  %466 = vmatpush.msra.mxu0 0.0
  %467 = vmatpush.msra.mxu0 0.0
  %468 = vmatpush.msra.mxu0 0.0
  %469 = vmatpush.msra.mxu0 0.0
  %470 = vmatpush.msra.mxu0 0.0
  %471 = vmatpush.msra.mxu0 0.0
  %472 = vmatpush.msra.mxu0 0.0
  %473 = vmatpush.msra.mxu0 %v24
  %474 = vmatpush.msra.mxu0 %v23
  %475 = vmatpush.msra.mxu0 %v22
  %476 = vmatpush.msra.mxu0 %v21
  %477 = vmatmul.f32.gmra.mxu0 %v459
  %v478 = vpop.f32.mrf.mxu0
  %v479 = vadd.f32 0.0, %v478
  %480 = vdwg.mxu0
  %v481 = vadd.f32 %v196, %v479
  %v482 = vxor.u32 %v481, 2147483648
  %v483 = vmul.f32 %v482, 1.442695
  %v484 = vpow.pop %v483
  %v485 = vadd.f32 %v484, 1.0
  %v486 = vrcp.pop %v485
  %v487 = vmul.f32 %v485, %v486
  %v488 = vsub.f32 1.0, %v487
  %v489 = vmul.f32 %v486, %v488
  %v490 = vadd.f32 %v486, %v489
  %vm491 = vweird.f32 %v485
  %vm492 = vweird.f32 %v486
  %vm493 = vmor %vm491, %vm492
  %v494 = vsel %vm493, %v486, %v490
  %v495 = vand.u32 2147483647, %v485
  %vm496 = vcmp.eq.f32.partialorder %v495, 8.507059e+37
  %v497 = vand.u32 %v485, 2147483648
  %v498 = vor.u32 1.1754944e-38, %v497
  %v499 = vsel %vm496, %v498, %v494
  %v500 = vmul.f32 1.0, %v499
  %v501 = vmul.f32 %v243, %v500
  %v502 = vadd.f32 %v501, %v245
  %v503 = vmul.f32 %v502, %v449
  %505 = vrot.lane.b32.xlu0 %v502, 64
  %v506 = vpop.permute.xlu0 %505
  %v508 = vmul.f32 %v502, %v506
  %510 = vrot.lane.b32.xlu0 %v508, 32
  %v511 = vpop.permute.xlu0 %510
  %v513 = vadd.f32 %v503, %v511
  %v514 = vtanh.pop %v513
  %516 = vrot.lane.b32.xlu0 %v514, 64
  %v517 = vpop.permute.xlu0 %516
  %v519 = vmul.f32 %v502, %v517
  %521 = vrot.lane.b32.xlu0 %v519, 32
  %v522 = vpop.permute.xlu0 %521
  %v523 = vsel %vm199, %v522, 0
  %525 = vmatpush.msra.mxu0 0.0
  %526 = vmatpush.msra.mxu0 0.0
  %527 = vmatpush.msra.mxu0 0.0
  %528 = vmatpush.msra.mxu0 0.0
  %529 = vmatpush.msra.mxu0 0.0
  %530 = vmatpush.msra.mxu0 0.0
  %531 = vmatpush.msra.mxu0 0.0
  %532 = vmatpush.msra.mxu0 0.0
  %533 = vmatpush.msra.mxu0 0.0
  %534 = vmatpush.msra.mxu0 0.0
  %535 = vmatpush.msra.mxu0 0.0
  %536 = vmatpush.msra.mxu0 0.0
  %537 = vmatpush.msra.mxu0 %v24
  %538 = vmatpush.msra.mxu0 %v23
  %539 = vmatpush.msra.mxu0 %v22
  %540 = vmatpush.msra.mxu0 %v21
  %541 = vmatmul.f32.gmra.mxu0 %v523
  %v542 = vpop.f32.mrf.mxu0
  %v543 = vadd.f32 0.0, %v542
  %544 = vdwg.mxu0
  %v545 = vadd.f32 %v197, %v543
  %v546 = vxor.u32 %v545, 2147483648
  %v547 = vmul.f32 %v546, 1.442695
  %v548 = vpow.pop %v547
  %v549 = vadd.f32 %v548, 1.0
  %v550 = vrcp.pop %v549
  %v551 = vmul.f32 %v549, %v550
  %v552 = vsub.f32 1.0, %v551
  %v553 = vmul.f32 %v550, %v552
  %v554 = vadd.f32 %v550, %v553
  %vm555 = vweird.f32 %v549
  %vm556 = vweird.f32 %v550
  %vm557 = vmor %vm555, %vm556
  %v558 = vsel %vm557, %v550, %v554
  %v559 = vand.u32 2147483647, %v549
  %vm560 = vcmp.eq.f32.partialorder %v559, 8.507059e+37
  %v561 = vand.u32 %v549, 2147483648
  %v562 = vor.u32 1.1754944e-38, %v561
  %v563 = vsel %vm560, %v562, %v558
  %v564 = vmul.f32 1.0, %v563
  %v565 = vmul.f32 %v243, %v564
  %v566 = vadd.f32 %v565, %v245
  %v567 = vmul.f32 %v566, %v513
  %569 = vrot.lane.b32.xlu0 %v566, 64
  %v570 = vpop.permute.xlu0 %569
  %v572 = vmul.f32 %v566, %v570
  %574 = vrot.lane.b32.xlu0 %v572, 32
  %v575 = vpop.permute.xlu0 %574
  %v577 = vadd.f32 %v567, %v575
  %v578 = vtanh.pop %v577
  %580 = vrot.lane.b32.xlu0 %v578, 64
  %v581 = vpop.permute.xlu0 %580
  %v583 = vmul.f32 %v566, %v581
  %585 = vrot.lane.b32.xlu0 %v583, 32
  %v586 = vpop.permute.xlu0 %585
  %v587 = vsel %vm199, %v586, 0
  %589 = vmatpush.msra.mxu0 0.0
  %590 = vmatpush.msra.mxu0 0.0
  %591 = vmatpush.msra.mxu0 0.0
  %592 = vmatpush.msra.mxu0 0.0
  %593 = vmatpush.msra.mxu0 0.0
  %594 = vmatpush.msra.mxu0 0.0
  %595 = vmatpush.msra.mxu0 0.0
  %596 = vmatpush.msra.mxu0 0.0
  %597 = vmatpush.msra.mxu0 0.0
  %598 = vmatpush.msra.mxu0 0.0
  %599 = vmatpush.msra.mxu0 0.0
  %600 = vmatpush.msra.mxu0 0.0
  %601 = vmatpush.msra.mxu0 %v24
  %602 = vmatpush.msra.mxu0 %v23
  %603 = vmatpush.msra.mxu0 %v22
  %604 = vmatpush.msra.mxu0 %v21
  %605 = vmatmul.f32.gmra.mxu0 %v587
  %v606 = vpop.f32.mrf.mxu0
  %v607 = vadd.f32 0.0, %v606
  %608 = vdwg.mxu0
  %v609 = vadd.f32 %v198, %v607
  %v610 = vxor.u32 %v609, 2147483648
  %v611 = vmul.f32 %v610, 1.442695
  %v612 = vpow.pop %v611
  %v613 = vadd.f32 %v612, 1.0
  %v614 = vrcp.pop %v613
  %v615 = vmul.f32 %v613, %v614
  %v616 = vsub.f32 1.0, %v615
  %v617 = vmul.f32 %v614, %v616
  %v618 = vadd.f32 %v614, %v617
  %vm619 = vweird.f32 %v613
  %vm620 = vweird.f32 %v614
  %vm621 = vmor %vm619, %vm620
  %v622 = vsel %vm621, %v614, %v618
  %v623 = vand.u32 2147483647, %v613
  %vm624 = vcmp.eq.f32.partialorder %v623, 8.507059e+37
  %v625 = vand.u32 %v613, 2147483648
  %v626 = vor.u32 1.1754944e-38, %v625
  %v627 = vsel %vm624, %v626, %v622
  %v628 = vmul.f32 1.0, %v627
  %v629 = vmul.f32 %v243, %v628
  %v630 = vadd.f32 %v629, %v245
  %v631 = vmul.f32 %v630, %v577
  %633 = vrot.lane.b32.xlu0 %v630, 64
  %v634 = vpop.permute.xlu0 %633
  %v636 = vmul.f32 %v630, %v634
  %638 = vrot.lane.b32.xlu0 %v636, 32
  %v639 = vpop.permute.xlu0 %638
  %v641 = vadd.f32 %v631, %v639
  %v642 = vtanh.pop %v641
  %644 = vrot.lane.b32.xlu0 %v642, 64
  %v645 = vpop.permute.xlu0 %644
  %v647 = vmul.f32 %v630, %v645
  %649 = vset.pattern.permute.xlu0 0
  %650 = vperm.xlu0 %649, %v18
  %v651 = vpop.permute.xlu0 %650
  %v653 = vperm.slane %v33, 0
  %v654 = vmul.f32 %v651, %v653
  %656 = vrot.lane.b32.xlu0 %v647, 32
  %v657 = vpop.permute.xlu0 %656
  %v658 = vsel %vm199, %v657, 0
  %660 = vmatpush.msra.mxu0 0.0
  %661 = vmatpush.msra.mxu0 0.0
  %662 = vmatpush.msra.mxu0 0.0
  %663 = vmatpush.msra.mxu0 0.0
  %664 = vmatpush.msra.mxu0 0.0
  %665 = vmatpush.msra.mxu0 0.0
  %666 = vmatpush.msra.mxu0 0.0
  %667 = vmatpush.msra.mxu0 0.0
  %668 = vmatpush.msra.mxu0 0.0
  %669 = vmatpush.msra.mxu0 0.0
  %670 = vmatpush.msra.mxu0 0.0
  %671 = vmatpush.msra.mxu0 0.0
  %672 = vmatpush.msra.mxu0 %v32
  %673 = vmatpush.msra.mxu0 %v31
  %674 = vmatpush.msra.mxu0 %v30
  %675 = vmatpush.msra.mxu0 %v29
  %676 = vmatmul.f32.gmra.mxu0 %v658
  %v677 = vpop.f32.mrf.mxu0
  %v678 = vadd.f32 %v654, %v677
  %679 = vdwg.mxu0
  %v680 = vperm.slane %v34, 0
  %v681 = vadd.f32 %v678, %v680
  %v682 = vtanh.pop %v681
  %v683 = vmul.f32 %v682, %v682
  %v684 = vsub.f32 1.0, %v683
  %v685 = vmul.f32 %v684, %v653
  %v686 = vld [vmem:[%s0 + $0x58] sm:$0xff]
  %v687 = vld [vmem:[%s0 + $0x60] sm:$0xff]
  %v688 = vld [vmem:[%s0 + $0x68] sm:$0xff]
  %v689 = vld [vmem:[%s0 + $0x70] sm:$0xff]
  %v690 = vld [vmem:[%s0 + $0x7a] sm:$0x1]
  %v692 = vsel %vm199, %v682, 0
  %v695 = vsel %vm199, %v685, 0
  %697 = vmatpush.msra.mxu0 0.0
  %698 = vmatpush.msra.mxu0 0.0
  %699 = vmatpush.msra.mxu0 0.0
  %700 = vmatpush.msra.mxu0 0.0
  %701 = vmatpush.msra.mxu0 0.0
  %702 = vmatpush.msra.mxu0 0.0
  %703 = vmatpush.msra.mxu0 0.0
  %704 = vmatpush.msra.mxu0 0.0
  %705 = vmatpush.msra.mxu0 0.0
  %706 = vmatpush.msra.mxu0 0.0
  %707 = vmatpush.msra.mxu0 0.0
  %708 = vmatpush.msra.mxu0 0.0
  %709 = vmatpush.msra.mxu0 %v689
  %710 = vmatpush.msra.mxu0 %v688
  %711 = vmatpush.msra.mxu0 %v687
  %712 = vmatpush.msra.mxu0 %v686
  %713 = vmatmul.f32.gmra.mxu0 %v692
  %v714 = vpop.f32.mrf.mxu0
  %v715 = vadd.f32 0.0, %v714
  %716 = vmatmul.f32.gmra.mxu0 %v695
  %v717 = vpop.f32.mrf.mxu0
  %v718 = vadd.f32 0.0, %v717
  %719 = vdwg.mxu0
  %v720 = vperm.slane %v690, 0
  %v721 = vadd.f32 %v715, %v720
  %v722 = vtanh.pop %v721
  %v723 = vmul.f32 %v722, %v722
  %v724 = vsub.f32 1.0, %v723
  %v725 = vmul.f32 %v724, %v718
  %v726 = vperm.slane %v35, 0
  %v727 = vmul.f32 %v722, %v726
  %v728 = vmul.f32 %v725, %v726
  %v729 = vsel %vm199, %v727, 0.0
  %730 = vadd.xlane.f32.xlu0 %v729
  %v731 = vpop.xlane.xlu0 %730
  %v732 = vsel %vm199, %v728, 0.0
  %733 = vadd.xlane.f32.xlu0 %v732
  %v734 = vpop.xlane.xlu0 %733
  %v735 = vperm.slane %v36, 0
  %v736 = vadd.f32 %v731, %v735
  %vm737 = vcmp.gt.f32.partialorder %v736, 20.0
  %v738 = vmin.f32 %v736, 20.0
  %v739 = vmul.f32 %v738, 1.442695
  %v740 = vpow.pop %v739
  %v741 = vadd.f32 %v740, 1.0
  %v742 = vlog2.pop %v741
  %v743 = vmul.f32 %v742, 0.6931472
  %v744 = vmul.f32 -0.5, %v740
  %v745 = vadd.f32 %v744, 1.0
  %v746 = vmul.f32 %v745, %v740
  %v747 = vand.u32 2147483647, %v740
  %vm748 = vcmp.lt.f32.partialorder %v747, 0.0004427343
  %v749 = vsel %vm748, %v746, %v743
  %v750 = vsel %vm737, %v736, %v749
  %v751 = vxor.u32 %v736, 2147483648
  %v752 = vmul.f32 %v751, 1.442695
  %v753 = vpow.pop %v752
  %v754 = vadd.f32 %v753, 1.0
  %v755 = vrcp.pop %v754
  %v756 = vmul.f32 %v754, %v755
  %v757 = vsub.f32 1.0, %v756
  %v758 = vmul.f32 %v755, %v757
  %v759 = vadd.f32 %v755, %v758
  %vm760 = vweird.f32 %v754
  %vm761 = vweird.f32 %v755
  %vm762 = vmor %vm760, %vm761
  %v763 = vsel %vm762, %v755, %v759
  %v764 = vand.u32 2147483647, %v754
  %vm765 = vcmp.eq.f32.partialorder %v764, 8.507059e+37
  %v766 = vand.u32 %v754, 2147483648
  %v767 = vor.u32 1.1754944e-38, %v766
  %v768 = vsel %vm765, %v767, %v763
  %v769 = vmul.f32 1.0, %v768
  %v770 = vmul.f32 %v769, %v734
  %vm771 = vcmp.gt.f32.partialorder %v750, 20.0
  %v772 = vmin.f32 %v750, 20.0
  %v773 = vmul.f32 %v772, 1.442695
  %v774 = vpow.pop %v773
  %v775 = vadd.f32 %v774, 1.0
  %v776 = vlog2.pop %v775
  %v777 = vmul.f32 %v776, 0.6931472
  %v778 = vmul.f32 -0.5, %v774
  %v779 = vadd.f32 %v778, 1.0
  %v780 = vmul.f32 %v779, %v774
  %v781 = vand.u32 2147483647, %v774
  %vm782 = vcmp.lt.f32.partialorder %v781, 0.0004427343
  %v783 = vsel %vm782, %v780, %v777
  %v784 = vsel %vm771, %v750, %v783
  %v785 = vxor.u32 %v750, 2147483648
  %v786 = vmul.f32 %v785, 1.442695
  %v787 = vpow.pop %v786
  %v788 = vadd.f32 %v787, 1.0
  %v789 = vrcp.pop %v788
  %v790 = vmul.f32 %v788, %v789
  %v791 = vsub.f32 1.0, %v790
  %v792 = vmul.f32 %v789, %v791
  %v793 = vadd.f32 %v789, %v792
  %vm794 = vweird.f32 %v788
  %vm795 = vweird.f32 %v789
  %vm796 = vmor %vm794, %vm795
  %v797 = vsel %vm796, %v789, %v793
  %v798 = vand.u32 2147483647, %v788
  %vm799 = vcmp.eq.f32.partialorder %v798, 8.507059e+37
  %v800 = vand.u32 %v788, 2147483648
  %v801 = vor.u32 1.1754944e-38, %v800
  %v802 = vsel %vm799, %v801, %v797
  %v803 = vmul.f32 1.0, %v802
  %v804 = vmul.f32 %v803, %v770
  %v805 = vmul.f32 %v804, 0.125
  %vm806 = vcmask 7168
  %v807 = vsel %vm806, %v784, 0.0
  %808 = vadd.xlane.f32.xlu0 %v807
  %v809 = vpop.xlane.xlu0 %808
  %v810 = vrot.slane %v809, 4
  %v811 = vadd.f32 %v809, %v810
  %v812 = vrot.slane %v811, 2
  %v813 = vadd.f32 %v811, %v812
  %v814 = vrot.slane %v813, 1
  %v815 = vadd.f32 %v813, %v814
  %s816 = vtos %v815
  %v817 = vstv %s816
  %v818 = vrcp.pop 8.0
  %v819 = vmul.f32 8.0, %v818
  %v820 = vsub.f32 1.0, %v819
  %v821 = vmul.f32 %v818, %v820
  %v822 = vadd.f32 %v818, %v821
  %vm823 = vweird.f32 %v818
  %v824 = vsel %vm823, %v818, %v822
  %v825 = vmul.f32 %v817, %v824
  %v826 = vadd.f32 %v805, 1e-10
  %v827 = vlog2.pop %v826
  %v828 = vmul.f32 %v827, 0.6931472
  %v829 = vsel %vm806, %v828, 0.0
  %830 = vadd.xlane.f32.xlu0 %v829
  %v831 = vpop.xlane.xlu0 %830
  %v832 = vrot.slane %v831, 4
  %v833 = vadd.f32 %v831, %v832
  %v834 = vrot.slane %v833, 2
  %v835 = vadd.f32 %v833, %v834
  %v836 = vrot.slane %v835, 1
  %v837 = vadd.f32 %v835, %v836
  %s838 = vtos %v837
  %v839 = vstv %s838
  %v840 = vmul.f32 %v839, %v824
  %v841 = vsub.f32 %v825, %v840
  %vm842 = vcmp.eq.s32.totalorder %v38, 0
  %v843 = vsel %vm842, %v841, 0.0
  %vm844 = vcmp.eq.s32.totalorder %v38, 1
  %v845 = vsel %vm844, %v840, 0.0
  %v846 = vadd.f32 %v843, %v845
  %vm847 = vcmp.eq.s32.totalorder %v38, 2
  %v848 = vsel %vm847, %v825, 0.0
  %v849 = vadd.f32 %v846, %v848
  %vm850 = vcmp.eq.s32.totalorder %v38, 4
  %852 = vset.pattern.permute.xlu0 0
  %853 = vperm.xlu0 %852, %v805
  %v854 = vpop.permute.xlu0 %853
  %v856 = vsel %vm850, %v854, %v849
  %857 = vst [vmem:[%s2] sm:$0xff] %v856
  // Predicated region
  $region10: #{gtpp_forward.1} parent=0 // pred_check
    _
  $region11: #{gtpp_forward.1} parent=0 // pred_check_branch
    %859 = sbr.rel (0) target = $region13
  $region12: #{gtpp_forward.1} parent=0 // pred_region
    _
  $region13: #{gtpp_forward.1} parent=0 // pred_fallthru
    _
  // Predicated region
  $region14: #{gtpp_forward.1} parent=0 // pred_check
    _
  $region15: #{gtpp_forward.1} parent=0 // pred_check_branch
    %861 = sbr.rel (0) target = $region17
  $region16: #{gtpp_forward.1} parent=0 // pred_region
    _
  $region17: #{gtpp_forward.1} parent=0 // pred_fallthru
    _

</llo_original>
